<compile_context>
chip_gen: v6e
topology: v6e:2x2x1
jax: 0.10.0
libtpu: 0.0.40
codegen_flags: <defaults>
</compile_context>

<pallas_src>
import jax
import jax.numpy as jnp
from jax.experimental import pallas as pl
from jax.experimental.pallas import tpu as pltpu

TARGET_BLOCK_BYTES = 2 * 1024 * 1024   # ~2 MiB per input pipeline buffer


def _collapse_to_3d(a):
    """Collapse leading dims, keeping the (tiled) trailing two dims intact.

    This reshape is layout-preserving on TPU (no relayout copy)."""
    if a.ndim >= 3:
        return a.reshape((-1,) + a.shape[-2:])
    if a.ndim == 2:
        return a.reshape((1,) + a.shape)
    return a.reshape((1, 1, -1))


def _padded_slab_bytes(h, w, dtype):
    """VMEM footprint of one (h, w) trailing slab, dtype-aware sublane packing."""
    itemsize = max(1, dtype.itemsize)
    sub = max(8, 32 // itemsize)          # 8 rows f32, 16 bf16, 32 int8/fp8
    h_pad = -(-h // sub) * sub
    w_pad = -(-w // 128) * 128
    return h_pad * w_pad * itemsize


def _num_tensorcore_splits():
    """2 on multi-TensorCore chips (v7x), 1 otherwise.  Safe fallback: 1."""
    try:
        info = pltpu.get_tpu_info()
        for name in ("num_cores", "core_count", "num_tensorcores",
                     "tensorcore_count", "cores_per_chip", "num_cores_per_chip"):
            v = getattr(info, name, None)
            if v:
                return max(1, min(int(v), 2))
    except Exception:
        pass
    try:
        v = getattr(jax.devices()[0], "num_cores", None)
        if v:
            return max(1, min(int(v), 2))
    except Exception:
        pass
    return 1


def _make_kernel(tile_b, steps_per_split, total_b, n_blocks,
                 has_partial_tail, has_overhang, nzw, zw):
    # nzw / zw are Python floats -> inlined as literals (no captured constants).

    def _accumulate(x_ref, t_ref, out_ref, blk, masked):
        x = x_ref[...]
        t = t_ref[...]
        w = jnp.where(t != 0, nzw, zw)                       # f32 weight select
        d = x.astype(jnp.float32) - t.astype(jnp.float32)
        vals = d * d * w
        if masked:
            # Zero out leading-dim rows past the true extent (tail block only).
            row = jax.lax.broadcasted_iota(jnp.int32, vals.shape, 0)
            vals = jnp.where(blk * tile_b + row < total_b, vals, 0.0)
        # Fold along the leading axis (pure elementwise VPU adds) into the
        # resident (1, H, W) accumulator block.
        out_ref[...] += jnp.sum(vals, axis=0)[None]

    def kernel(x_ref, t_ref, out_ref):
        k = pl.program_id(1)
        blk = pl.program_id(0) * steps_per_split + k

        # Zero this split's resident accumulator on its first step.
        @pl.when(k == 0)
        def _():
            out_ref[...] = jnp.zeros_like(out_ref)

        if has_partial_tail:
            # Steady state: unmasked.  Tail block: masked.  Overhang: skipped.
            @pl.when(blk < n_blocks - 1)
            def _():
                _accumulate(x_ref, t_ref, out_ref, blk, masked=False)

            @pl.when(blk == n_blocks - 1)
            def _():
                _accumulate(x_ref, t_ref, out_ref, blk, masked=True)
        elif has_overhang:
            @pl.when(blk < n_blocks)
            def _():
                _accumulate(x_ref, t_ref, out_ref, blk, masked=False)
        else:
            _accumulate(x_ref, t_ref, out_ref, blk, masked=False)

    return kernel


def zero_inflated_loss(inp, target, non_zero_weight=10.0, zero_weight=0.1):
    assert inp.shape == target.shape
    n = int(inp.size)
    if n == 0:
        return jnp.float32(jnp.nan)   # torch .mean() of an empty tensor is nan

    x3 = _collapse_to_3d(inp)
    t3 = _collapse_to_3d(target)
    B, H, W = x3.shape

    # Byte-sized, dtype-aware leading-dim tiling (no alignment constraint on
    # the leading dim; trailing dims are kept whole).
    slab_bytes = _padded_slab_bytes(H, W, x3.dtype)
    tile_b = int(max(1, min(B, TARGET_BLOCK_BYTES // slab_bytes)))
    n_blocks = -(-B // tile_b)

    num_splits = _num_tensorcore_splits()
    if n_blocks < num_splits:
        num_splits = 1
    steps_per_split = -(-n_blocks // num_splits)

    has_partial_tail = (B % tile_b) != 0
    has_overhang = num_splits * steps_per_split > n_blocks

    kernel = _make_kernel(tile_b, steps_per_split, B, n_blocks,
                          has_partial_tail, has_overhang,
                          float(non_zero_weight), float(zero_weight))

    def in_index_map(s, k):
        # Clamp overhanging steps to a valid block; their compute is skipped
        # inside the kernel so they contribute exactly 0.
        return (jnp.minimum(s * steps_per_split + k, n_blocks - 1), 0, 0)

    partials = pl.pallas_call(
        kernel,
        out_shape=jax.ShapeDtypeStruct((num_splits, H, W), jnp.float32),
        grid_spec=pltpu.PrefetchScalarGridSpec(
            num_scalar_prefetch=0,
            grid=(num_splits, steps_per_split),
            in_specs=[
                pl.BlockSpec((tile_b, H, W), in_index_map),
                pl.BlockSpec((tile_b, H, W), in_index_map),
            ],
            out_specs=pl.BlockSpec((1, H, W), lambda s, k: (s, 0, 0)),
        ),
        compiler_params=pltpu.CompilerParams(
            dimension_semantics=("parallel", "arbitrary"),
            vmem_limit_bytes=32 * 1024 * 1024),
    )(x3, t3)

    # Single tiny final reduce + mean normalization (per-split partial sums).
    return jnp.sum(partials) / jnp.float32(n)


def zero_inflated_loss_ref(inp, target, non_zero_weight=10.0, zero_weight=0.1):
    inp = inp.astype(jnp.float32)
    target = target.astype(jnp.float32)
    sq = (inp - target) ** 2
    w = jnp.where(target != 0, non_zero_weight, zero_weight)
    return jnp.mean(sq * w)


if __name__ == "__main__":
    key = jax.random.PRNGKey(0)
    k1, k2, k3, k4, k5, k6 = jax.random.split(key, 6)

    # 1) Small NCHW-style prediction/target maps (single-block path).
    shape = (2, 4, 16, 16)
    inp = jax.random.normal(k1, shape, dtype=jnp.float32)
    raw = jax.random.normal(k2, shape, dtype=jnp.float32)
    target = jnp.where(jax.random.uniform(k3, shape) < 0.6, 0.0, raw)

    out = zero_inflated_loss(inp, target)
    jax.block_until_ready(out)
    ref = zero_inflated_loss_ref(inp, target)
    assert jnp.allclose(out, ref, rtol=1e-4, atol=1e-6), (out, ref)

    # 2) Ragged shape: exercises multi-block grid + masked tail block.
    shape2 = (3, 5, 17, 11)
    inp2 = jax.random.normal(k4, shape2, dtype=jnp.float32)
    raw2 = jax.random.normal(k5, shape2, dtype=jnp.float32)
    target2 = jnp.where(jax.random.uniform(k6, shape2) < 0.6, 0.0, raw2)

    out2 = zero_inflated_loss(inp2, target2)
    jax.block_until_ready(out2)
    ref2 = zero_inflated_loss_ref(inp2, target2)
    assert jnp.allclose(out2, ref2, rtol=1e-4, atol=1e-6), (out2, ref2)

    # 3) bf16 inputs: exercises the dtype-aware tiling / native-dtype ingest.
    inp3 = inp.astype(jnp.bfloat16)
    target3 = target.astype(jnp.bfloat16)
    out3 = zero_inflated_loss(inp3, target3)
    jax.block_until_ready(out3)
    ref3 = zero_inflated_loss_ref(inp3, target3)
    assert jnp.allclose(out3, ref3, rtol=1e-3, atol=1e-6), (out3, ref3)

    print("KERNEL_OK")
</pallas_src>

<mosaic_0001>
module attributes {stable_mosaic.version = 11 : i64} {
  func.func @kernel(%arg0: i32, %arg1: i32, %arg2: memref<8x16x16xf32, #tpu.memory_space<vmem>>, %arg3: memref<8x16x16xf32, #tpu.memory_space<vmem>>, %arg4: memref<1x16x16xf32, #tpu.memory_space<vmem>>) attributes {dimension_semantics = [#tpu.dimension_semantics<parallel>, #tpu.dimension_semantics<arbitrary>], iteration_bounds = array<i64: 1, 1>, scalar_prefetch = 0 : i64, scratch_operands = 0 : i64, tpu.core_type = #tpu.core_type<tc>, window_params = [{transform_indices = @transform_0, window_bounds = array<i64: 8, 16, 16>}, {transform_indices = @transform_1, window_bounds = array<i64: 8, 16, 16>}, {transform_indices = @transform_2, window_bounds = array<i64: 1, 16, 16>}]} {
    %c0_i32 = arith.constant 0 : i32
    %0 = arith.cmpi eq, %arg1, %c0_i32 : i32
    %1 = arith.extui %0 : i1 to i32
    %c0_i32_0 = arith.constant 0 : i32
    %2 = arith.cmpi ne, %1, %c0_i32_0 : i32
    scf.if %2 {
      %cst_15 = arith.constant 0.000000e+00 : f32
      %18 = vector.broadcast %cst_15 : f32 to vector<1x16x16xf32>
      %c0_16 = arith.constant 0 : index
      %c0_17 = arith.constant 0 : index
      %c0_18 = arith.constant 0 : index
      %19 = vector.load %arg4[%c0_16, %c0_17, %c0_18] : memref<1x16x16xf32, #tpu.memory_space<vmem>>, vector<1x16x16xf32>
      tpu.vector_store %arg4[%c0_16, %c0_17, %c0_18], %18 {strides = array<i32>} : memref<1x16x16xf32, #tpu.memory_space<vmem>>, vector<1x16x16xf32>,
    } else {
    }
    %c0 = arith.constant 0 : index
    %c0_1 = arith.constant 0 : index
    %c0_2 = arith.constant 0 : index
    %3 = vector.load %arg2[%c0, %c0_1, %c0_2] : memref<8x16x16xf32, #tpu.memory_space<vmem>>, vector<8x16x16xf32>
    %c0_3 = arith.constant 0 : index
    %c0_4 = arith.constant 0 : index
    %c0_5 = arith.constant 0 : index
    %4 = vector.load %arg3[%c0_3, %c0_4, %c0_5] : memref<8x16x16xf32, #tpu.memory_space<vmem>>, vector<8x16x16xf32>
    %cst = arith.constant 0.000000e+00 : f32
    %5 = vector.broadcast %cst : f32 to vector<8x16x16xf32>
    %6 = arith.cmpf one, %4, %5 : vector<8x16x16xf32>
    %cst_6 = arith.constant 1.000000e+01 : f32
    %cst_7 = arith.constant 1.000000e-01 : f32
    %7 = vector.broadcast %cst_6 : f32 to vector<8x16x16xf32>
    %8 = vector.broadcast %cst_7 : f32 to vector<8x16x16xf32>
    %9 = arith.select %6, %7, %8 : vector<8x16x16xi1>, vector<8x16x16xf32>
    %10 = arith.subf %3, %4 : vector<8x16x16xf32>
    %11 = arith.mulf %10, %10 : vector<8x16x16xf32>
    %12 = arith.mulf %11, %9 : vector<8x16x16xf32>
    %c0_8 = arith.constant 0 : index
    %c0_9 = arith.constant 0 : index
    %c0_10 = arith.constant 0 : index
    %13 = vector.load %arg4[%c0_8, %c0_9, %c0_10] : memref<1x16x16xf32, #tpu.memory_space<vmem>>, vector<1x16x16xf32>
    %cst_11 = arith.constant dense<0.000000e+00> : vector<16x16xf32>
    %14 = vector.multi_reduction <add>, %12, %cst_11 [0] : vector<8x16x16xf32> to vector<16x16xf32>
    %15 = vector.shape_cast %14 : vector<16x16xf32> to vector<1x16x16xf32>
    %16 = arith.addf %13, %15 : vector<1x16x16xf32>
    %c0_12 = arith.constant 0 : index
    %c0_13 = arith.constant 0 : index
    %c0_14 = arith.constant 0 : index
    %17 = vector.load %arg4[%c0_12, %c0_13, %c0_14] : memref<1x16x16xf32, #tpu.memory_space<vmem>>, vector<1x16x16xf32>
    tpu.vector_store %arg4[%c0_12, %c0_13, %c0_14], %16 {strides = array<i32>} : memref<1x16x16xf32, #tpu.memory_space<vmem>>, vector<1x16x16xf32>,
    return
  }
  func.func @transform_0(%arg0: i32, %arg1: i32) -> (i32, i32, i32) {
    %c1_i32 = arith.constant 1 : i32
    %0 = arith.muli %arg0, %c1_i32 : i32
    %1 = arith.addi %0, %arg1 : i32
    %c0_i32 = arith.constant 0 : i32
    %2 = arith.minsi %1, %c0_i32 : i32
    %c0_i32_0 = arith.constant 0 : i32
    %c0_i32_1 = arith.constant 0 : i32
    %c0_i32_2 = arith.constant 0 : i32
    return %2, %c0_i32_0, %c0_i32_1 : i32, i32, i32
  }
  func.func @transform_1(%arg0: i32, %arg1: i32) -> (i32, i32, i32) {
    %c1_i32 = arith.constant 1 : i32
    %0 = arith.muli %arg0, %c1_i32 : i32
    %1 = arith.addi %0, %arg1 : i32
    %c0_i32 = arith.constant 0 : i32
    %2 = arith.minsi %1, %c0_i32 : i32
    %c0_i32_0 = arith.constant 0 : i32
    %c0_i32_1 = arith.constant 0 : i32
    %c0_i32_2 = arith.constant 0 : i32
    return %2, %c0_i32_0, %c0_i32_1 : i32, i32, i32
  }
  func.func @transform_2(%arg0: i32, %arg1: i32) -> (i32, i32, i32) {
    %c0_i32 = arith.constant 0 : i32
    %c0_i32_0 = arith.constant 0 : i32
    %c0_i32_1 = arith.constant 0 : i32
    return %arg0, %c0_i32, %c0_i32_0 : i32, i32, i32
  }
}

</mosaic_0001>

<llo_original>
// kernel: tpu_custom_call.1
$region0: #{tpu_custom_call.1}
  #allocation0 [shape = 'u32[]', space=smem, size = 0x4, offset = 0x4, fixed_abs, tag = 'smem constant byte address 0x4 - core index']
  #allocation1 [shape = 'u32[144,128]{1,0:T(1,128)}', space=vmem, size = 0x12000, scoped, tag = 'internal scratch']
  %s0 = inlined_call_operand.hbm [shape: f32[8,16,16], index: 0, kind: input, shape index: {}]
  %s1 = inlined_call_operand.hbm [shape: f32[8,16,16], index: 1, kind: input, shape index: {}]
  %s2 = inlined_call_operand.hbm [shape: f32[1,16,16], index: 2, kind: output, shape index: {}]
  %s3 = sld [smem:[#allocation0]]
  $region30: #{tpu_custom_call.1} parent=0
    _
  %s5 = ssub.s32 1, %s3
  %s6 = scalar_select 0, %s5, %s3
  $region1: #{tpu_custom_call.1} parent=0
    #allocation2 [shape = 'u8[65536]{0}', space=vmem, size = 0x10000, scoped, tag = 'input window, operand 0, single buffered']
    #allocation3 [shape = 's32[1]{0}', space=sflag, size = 0x4, scoped, tag = 'scoped memory for tpu_custom_call.1']
    #allocation4 [shape = 's32[1]{0}', space=sflag, size = 0x4, scoped, tag = 'scoped memory for tpu_custom_call.1']
    #allocation5 [shape = 'u8[65536]{0}', space=vmem, size = 0x10000, scoped, tag = 'input window, operand 1, single buffered']
    #allocation6 [shape = 's32[1]{0}', space=sflag, size = 0x4, scoped, tag = 'scoped memory for tpu_custom_call.1']
    #allocation7 [shape = 'u8[8192]{0}', space=vmem, size = 0x2000, scoped, tag = 'output window, operand 0, single buffered']
    %7 = vsyncpa [#allocation3], 0
    %8 = vsyncpa [#allocation6], 0
    %9 = vsyncpa [#allocation4], 0
    // Predicated region
    $region2: #{tpu_custom_call.1} parent=1 // pred_check
      _
    $region3: #{tpu_custom_call.1} parent=1 // pred_check_branch
      %11 = sbr.rel (0) target = $region5
    $region4: #{tpu_custom_call.1} parent=1 // pred_region
      %s12 = sadd.s32 0, 0
      %p13 = scmp.lt.s32.totalorder %s12, 0
      %s14 = scalar_select %p13, %s12, 0
      %s15 = smul.u32 8, %s14
      %s17 = ssub.s32 2048, 2048
      %18 = vsyncadd [#allocation3], %s17
      %s19 = smul.addr %s15, 2
      %s20 = smul.addr %s19, 128
      %s21 = scalar_lea.hbm %s0, %s20
      %s22 = sshll.u32 [#allocation2], 4
      %s23 = int_to_ptr.vmem [resolvable:$true] %s22
      %28 = dma.hbm_to_vmem [thread:$0]  %s21, 2048, %s23, [#allocation3], 128, 128, 8
    $region5: #{tpu_custom_call.1} parent=1 // pred_fallthru
      _
    // Predicated region
    $region6: #{tpu_custom_call.1} parent=1 // pred_check
      _
    $region7: #{tpu_custom_call.1} parent=1 // pred_check_branch
      %30 = sbr.rel (0) target = $region9
    $region8: #{tpu_custom_call.1} parent=1 // pred_region
      %s31 = sadd.s32 0, 0
      %p32 = scmp.lt.s32.totalorder %s31, 0
      %s33 = scalar_select %p32, %s31, 0
      %s34 = smul.u32 8, %s33
      %s36 = ssub.s32 2048, 2048
      %37 = vsyncadd [#allocation6], %s36
      %s38 = smul.addr %s34, 2
      %s39 = smul.addr %s38, 128
      %s40 = scalar_lea.hbm %s1, %s39
      %s41 = sshll.u32 [#allocation5], 4
      %s42 = int_to_ptr.vmem [resolvable:$true] %s41
      %47 = dma.hbm_to_vmem [thread:$0]  %s40, 2048, %s42, [#allocation6], 128, 128, 8
    $region9: #{tpu_custom_call.1} parent=1 // pred_fallthru
      _
    // Predicated region
    $region10: #{tpu_custom_call.1} parent=1 // pred_check
      _
    $region11: #{tpu_custom_call.1} parent=1 // pred_check_branch
      %49 = sbr.rel (0) target = $region13
    $region12: #{tpu_custom_call.1} parent=1 // pred_region
      %50 = dma.done [#allocation3], 2048
    $region13: #{tpu_custom_call.1} parent=1 // pred_fallthru
      _
    // Predicated region
    $region14: #{tpu_custom_call.1} parent=1 // pred_check
      _
    $region15: #{tpu_custom_call.1} parent=1 // pred_check_branch
      %52 = sbr.rel (0) target = $region17
    $region16: #{tpu_custom_call.1} parent=1 // pred_region
      %53 = dma.done [#allocation6], 2048
    $region17: #{tpu_custom_call.1} parent=1 // pred_fallthru
      _
    %s54 = sadd.s32 0, 0
    %p55 = scmp.lt.s32.totalorder %s54, 0
    %s56 = scalar_select %p55, %s54, 0
    %s57 = smul.u32 8, %s56
    %s58 = sadd.s32 0, 0
    %p59 = scmp.lt.s32.totalorder %s58, 0
    %s60 = scalar_select %p59, %s58, 0
    %s61 = smul.u32 8, %s60
    %p62 = scmp.eq.s32.totalorder 0, 0
    // Predicated region
    $region18: #{tpu_custom_call.1} parent=1 // pred_check
      %p63 = pneg %p62
    $region19: #{tpu_custom_call.1} parent=1 // pred_check_branch
      %65 = sbr.rel (%p63) target = $region21
    $region20: #{tpu_custom_call.1} parent=1 // pred_region
      %vm66 = vcmask 130048
      %67 = vst.msk [vmem:[#allocation7] sm:$0xff] %vm66, 0.0
      %68 = vst.msk [vmem:[#allocation7 + $0x8] sm:$0xff] %vm66, 0.0
    $region21: #{tpu_custom_call.1} parent=1 // pred_fallthru
      _
    %v69 = vld [vmem:[#allocation2] sm:$0xff]
    %v70 = vld [vmem:[#allocation2 + $0x8] sm:$0xff]
    %v71 = vld [vmem:[#allocation2 + $0x10] sm:$0xff]
    %v72 = vld [vmem:[#allocation2 + $0x18] sm:$0xff]
    %v73 = vld [vmem:[#allocation2 + $0x20] sm:$0xff]
    %v74 = vld [vmem:[#allocation2 + $0x28] sm:$0xff]
    %v75 = vld [vmem:[#allocation2 + $0x30] sm:$0xff]
    %v76 = vld [vmem:[#allocation2 + $0x38] sm:$0xff]
    %v77 = vld [vmem:[#allocation2 + $0x40] sm:$0xff]
    %v78 = vld [vmem:[#allocation2 + $0x48] sm:$0xff]
    %v79 = vld [vmem:[#allocation2 + $0x50] sm:$0xff]
    %v80 = vld [vmem:[#allocation2 + $0x58] sm:$0xff]
    %v81 = vld [vmem:[#allocation2 + $0x60] sm:$0xff]
    %v82 = vld [vmem:[#allocation2 + $0x68] sm:$0xff]
    %v83 = vld [vmem:[#allocation2 + $0x70] sm:$0xff]
    %v84 = vld [vmem:[#allocation2 + $0x78] sm:$0xff]
    %v85 = vld [vmem:[#allocation5] sm:$0xff]
    %v86 = vld [vmem:[#allocation5 + $0x8] sm:$0xff]
    %v87 = vld [vmem:[#allocation5 + $0x10] sm:$0xff]
    %v88 = vld [vmem:[#allocation5 + $0x18] sm:$0xff]
    %v89 = vld [vmem:[#allocation5 + $0x20] sm:$0xff]
    %v90 = vld [vmem:[#allocation5 + $0x28] sm:$0xff]
    %v91 = vld [vmem:[#allocation5 + $0x30] sm:$0xff]
    %v92 = vld [vmem:[#allocation5 + $0x38] sm:$0xff]
    %v93 = vld [vmem:[#allocation5 + $0x40] sm:$0xff]
    %v94 = vld [vmem:[#allocation5 + $0x48] sm:$0xff]
    %v95 = vld [vmem:[#allocation5 + $0x50] sm:$0xff]
    %v96 = vld [vmem:[#allocation5 + $0x58] sm:$0xff]
    %v97 = vld [vmem:[#allocation5 + $0x60] sm:$0xff]
    %v98 = vld [vmem:[#allocation5 + $0x68] sm:$0xff]
    %v99 = vld [vmem:[#allocation5 + $0x70] sm:$0xff]
    %v100 = vld [vmem:[#allocation5 + $0x78] sm:$0xff]
    %vm101 = vcmp.ne.f32.partialorder %v85, 0.0
    %vm102 = vcmp.ne.f32.partialorder %v86, 0.0
    %vm103 = vcmp.ne.f32.partialorder %v87, 0.0
    %vm104 = vcmp.ne.f32.partialorder %v88, 0.0
    %vm105 = vcmp.ne.f32.partialorder %v89, 0.0
    %vm106 = vcmp.ne.f32.partialorder %v90, 0.0
    %vm107 = vcmp.ne.f32.partialorder %v91, 0.0
    %vm108 = vcmp.ne.f32.partialorder %v92, 0.0
    %vm109 = vcmp.ne.f32.partialorder %v93, 0.0
    %vm110 = vcmp.ne.f32.partialorder %v94, 0.0
    %vm111 = vcmp.ne.f32.partialorder %v95, 0.0
    %vm112 = vcmp.ne.f32.partialorder %v96, 0.0
    %vm113 = vcmp.ne.f32.partialorder %v97, 0.0
    %vm114 = vcmp.ne.f32.partialorder %v98, 0.0
    %vm115 = vcmp.ne.f32.partialorder %v99, 0.0
    %vm116 = vcmp.ne.f32.partialorder %v100, 0.0
    %v117 = vsel %vm101, 10.0, 0.1
    %v118 = vsel %vm102, 10.0, 0.1
    %v119 = vsel %vm103, 10.0, 0.1
    %v120 = vsel %vm104, 10.0, 0.1
    %v121 = vsel %vm105, 10.0, 0.1
    %v122 = vsel %vm106, 10.0, 0.1
    %v123 = vsel %vm107, 10.0, 0.1
    %v124 = vsel %vm108, 10.0, 0.1
    %v125 = vsel %vm109, 10.0, 0.1
    %v126 = vsel %vm110, 10.0, 0.1
    %v127 = vsel %vm111, 10.0, 0.1
    %v128 = vsel %vm112, 10.0, 0.1
    %v129 = vsel %vm113, 10.0, 0.1
    %v130 = vsel %vm114, 10.0, 0.1
    %v131 = vsel %vm115, 10.0, 0.1
    %v132 = vsel %vm116, 10.0, 0.1
    %v133 = vsub.f32 %v69, %v85
    %v134 = vsub.f32 %v70, %v86
    %v135 = vsub.f32 %v71, %v87
    %v136 = vsub.f32 %v72, %v88
    %v137 = vsub.f32 %v73, %v89
    %v138 = vsub.f32 %v74, %v90
    %v139 = vsub.f32 %v75, %v91
    %v140 = vsub.f32 %v76, %v92
    %v141 = vsub.f32 %v77, %v93
    %v142 = vsub.f32 %v78, %v94
    %v143 = vsub.f32 %v79, %v95
    %v144 = vsub.f32 %v80, %v96
    %v145 = vsub.f32 %v81, %v97
    %v146 = vsub.f32 %v82, %v98
    %v147 = vsub.f32 %v83, %v99
    %v148 = vsub.f32 %v84, %v100
    %v149 = vmul.f32 %v133, %v133
    %v150 = vmul.f32 %v134, %v134
    %v151 = vmul.f32 %v135, %v135
    %v152 = vmul.f32 %v136, %v136
    %v153 = vmul.f32 %v137, %v137
    %v154 = vmul.f32 %v138, %v138
    %v155 = vmul.f32 %v139, %v139
    %v156 = vmul.f32 %v140, %v140
    %v157 = vmul.f32 %v141, %v141
    %v158 = vmul.f32 %v142, %v142
    %v159 = vmul.f32 %v143, %v143
    %v160 = vmul.f32 %v144, %v144
    %v161 = vmul.f32 %v145, %v145
    %v162 = vmul.f32 %v146, %v146
    %v163 = vmul.f32 %v147, %v147
    %v164 = vmul.f32 %v148, %v148
    %v165 = vmul.f32 %v149, %v117
    %v166 = vmul.f32 %v150, %v118
    %v167 = vmul.f32 %v151, %v119
    %v168 = vmul.f32 %v152, %v120
    %v169 = vmul.f32 %v153, %v121
    %v170 = vmul.f32 %v154, %v122
    %v171 = vmul.f32 %v155, %v123
    %v172 = vmul.f32 %v156, %v124
    %v173 = vmul.f32 %v157, %v125
    %v174 = vmul.f32 %v158, %v126
    %v175 = vmul.f32 %v159, %v127
    %v176 = vmul.f32 %v160, %v128
    %v177 = vmul.f32 %v161, %v129
    %v178 = vmul.f32 %v162, %v130
    %v179 = vmul.f32 %v163, %v131
    %v180 = vmul.f32 %v164, %v132
    %v181 = vld [vmem:[#allocation7] sm:$0xff]
    %v182 = vld [vmem:[#allocation7 + $0x8] sm:$0xff]
    %vm183 = vcmask 130048
    %v184 = vsel %vm183, %v165, 0.0
    %v185 = vsel %vm183, %v167, 0.0
    %v186 = vadd.f32 %v184, %v185
    %v187 = vsel %vm183, %v169, 0.0
    %v188 = vadd.f32 %v186, %v187
    %v189 = vsel %vm183, %v171, 0.0
    %v190 = vadd.f32 %v188, %v189
    %v191 = vsel %vm183, %v173, 0.0
    %v192 = vadd.f32 %v190, %v191
    %v193 = vsel %vm183, %v175, 0.0
    %v194 = vadd.f32 %v192, %v193
    %v195 = vsel %vm183, %v177, 0.0
    %v196 = vadd.f32 %v194, %v195
    %v197 = vsel %vm183, %v179, 0.0
    %v198 = vadd.f32 %v196, %v197
    %v199 = vsel %vm183, %v166, 0.0
    %v200 = vsel %vm183, %v168, 0.0
    %v201 = vadd.f32 %v199, %v200
    %v202 = vsel %vm183, %v170, 0.0
    %v203 = vadd.f32 %v201, %v202
    %v204 = vsel %vm183, %v172, 0.0
    %v205 = vadd.f32 %v203, %v204
    %v206 = vsel %vm183, %v174, 0.0
    %v207 = vadd.f32 %v205, %v206
    %v208 = vsel %vm183, %v176, 0.0
    %v209 = vadd.f32 %v207, %v208
    %v210 = vsel %vm183, %v178, 0.0
    %v211 = vadd.f32 %v209, %v210
    %v212 = vsel %vm183, %v180, 0.0
    %v213 = vadd.f32 %v211, %v212
    %v214 = vadd.f32 %v181, %v198
    %v215 = vadd.f32 %v182, %v213
    %216 = vst.msk [vmem:[#allocation7] sm:$0xff] %vm183, %v214
    %217 = vst.msk [vmem:[#allocation7 + $0x8] sm:$0xff] %vm183, %v215
    // Predicated region
    $region22: #{tpu_custom_call.1} parent=1 // pred_check
      _
    $region23: #{tpu_custom_call.1} parent=1 // pred_check_branch
      %219 = sbr.rel (0) target = $region25
    $region24: #{tpu_custom_call.1} parent=1 // pred_region
      %s221 = ssub.s32 256, 256
      %222 = vsyncadd [#allocation4], %s221
      %s223 = sshll.u32 [#allocation7], 4
      %s224 = int_to_ptr.vmem [resolvable:$true] %s223
      %229 = dma.vmem_to_hbm [thread:$0]  %s224, 256, %s2, [#allocation4], 128, 128, 8
    $region25: #{tpu_custom_call.1} parent=1 // pred_fallthru
      _
    // Predicated region
    $region26: #{tpu_custom_call.1} parent=1 // pred_check
      _
    $region27: #{tpu_custom_call.1} parent=1 // pred_check_branch
      %231 = sbr.rel (0) target = $region29
    $region28: #{tpu_custom_call.1} parent=1 // pred_region
      %232 = dma.done [#allocation4], 256
    $region29: #{tpu_custom_call.1} parent=1 // pred_fallthru
      _
    %233 = vsyncpa [#allocation3], 1
    %234 = vsyncpa [#allocation6], 1
    %235 = vsyncpa [#allocation4], 1

</llo_original>
